<compile_context>
chip_gen: v7x
topology: tpu7x:2x2x1
jax: 0.10.0
libtpu: 0.0.40
codegen_flags: <defaults>
</compile_context>

<pallas_src>
import functools

import jax
import jax.numpy as jnp
import numpy as np
from jax import lax
from jax.experimental import pallas as pl
from jax.experimental.pallas import tpu as pltpu

# Below this encoder length the per-row store loop is fully unrolled at trace
# time (static offsets -> best codegen, trivial compile-time cost).
_STATIC_UNROLL_MAX = 128


def _row_spans(enc_len, finallength, reps, gapstart):
    """Static output-row span [start, end) written from each source row i."""
    spans = []
    for i in range(enc_len):
        s = 0 if i == 0 else gapstart + i * reps
        e = finallength if i == enc_len - 1 else gapstart + (i + 1) * reps
        spans.append((s, e))
    return spans


def _repitition_kernel(x_ref, o_ref, *, enc_len, finallength, reps, gapstart):
    # x_ref : (1, enc_len, bd)       one batch element's encoding tile (VMEM)
    # o_ref : (1, finallength, bd)   repeated output tile
    #
    # Output-row -> source-row mapping (all offsets static):
    #   rows [0, gapstart)                            <- row 0      (leading gap)
    #   rows [gapstart + i*reps, gapstart+(i+1)*reps) <- row i
    #   rows [gapstart + enc_len*reps, finallength)   <- row L-1    (trailing gap)
    bd = o_ref.shape[-1]

    if enc_len <= _STATIC_UNROLL_MAX:
        # Fully static: every slice offset/extent is a compile-time constant.
        for i, (s, e) in enumerate(_row_spans(enc_len, finallength, reps, gapstart)):
            row = x_ref[0, i:i + 1, :]                              # (1, bd)
            o_ref[0, s:e, :] = jnp.broadcast_to(row, (e - s, bd))
    else:
        # First / last source rows also cover the leading / trailing gaps.
        first_end = gapstart + reps
        row0 = x_ref[0, 0:1, :]
        o_ref[0, 0:first_end, :] = jnp.broadcast_to(row0, (first_end, bd))

        last_start = gapstart + (enc_len - 1) * reps
        row_last = x_ref[0, enc_len - 1:enc_len, :]
        o_ref[0, last_start:finallength, :] = jnp.broadcast_to(
            row_last, (finallength - last_start, bd))

        # Middle source rows: each expands into `reps` consecutive output rows.
        def body(i, carry):
            row = x_ref[0, pl.ds(i, 1), :]                          # (1, bd)
            o_ref[0, pl.ds(gapstart + i * reps, reps), :] = jnp.broadcast_to(
                row, (reps, bd))
            return carry

        lax.fori_loop(1, enc_len - 1, body, 0)


def _pick_dim_tile(enc_len, finallength, dim, itemsize, budget_bytes=8 << 20):
    """Largest lane-aligned feature tile whose double-buffered (in+out) blocks
    stay under `budget_bytes`; full dim when no clean 128-multiple tiling exists
    or when the full blocks already fit."""
    per_col = 2 * (enc_len + finallength) * itemsize  # double-buffered in+out, per feature column
    if dim % 128 != 0 or per_col * dim <= budget_bytes:
        return dim
    best = 128
    for t in range(128, dim, 128):
        if dim % t == 0 and per_col * t <= budget_bytes:
            best = t
    return best


def repitition(encoding, finallength: int):
    """Pallas TPU implementation of Repitition.forward(encoding, finallength)."""
    B, enc_len, dim = encoding.shape
    finallength = int(finallength)
    assert finallength >= enc_len, "finallength must be >= encoder length"
    reps = finallength // enc_len
    gap = finallength % enc_len
    # gap == 0 -> gapstart = 0 ; gap == 1 -> gapstart = 1 (start prepended)
    # gap >= 2 -> gapstart = ceil(gap/2), gapend = floor(gap/2)
    gapstart = (gap + 1) // 2

    itemsize = jnp.dtype(encoding.dtype).itemsize
    bd = _pick_dim_tile(enc_len, finallength, dim, itemsize)
    n_dim_tiles = dim // bd

    kernel = functools.partial(
        _repitition_kernel,
        enc_len=enc_len,
        finallength=finallength,
        reps=reps,
        gapstart=gapstart,
    )

    bytes_accessed = B * (enc_len + finallength) * dim * itemsize
    cost = pl.CostEstimate(flops=0, transcendentals=0, bytes_accessed=bytes_accessed)

    # Double-buffered in/out blocks at the chosen tile width.  Raise the scoped
    # VMEM limit only if even this tiling exceeds the most conservative default
    # (16 MiB on v5e); cap below v7x's 64 MiB physical VMEM per TensorCore.
    block_bytes = 2 * (enc_len + finallength) * bd * itemsize
    vmem_limit = None
    if block_bytes + (1 << 20) > (16 << 20):
        vmem_limit = min(block_bytes + (2 << 20), 56 << 20)

    return pl.pallas_call(
        kernel,
        out_shape=jax.ShapeDtypeStruct((B, finallength, dim), encoding.dtype),
        grid=(B, n_dim_tiles),
        in_specs=[pl.BlockSpec((1, enc_len, bd), lambda b, d: (b, 0, d))],
        out_specs=pl.BlockSpec((1, finallength, bd), lambda b, d: (b, 0, d)),
        compiler_params=pltpu.CompilerParams(
            dimension_semantics=("parallel", "parallel"),
            vmem_limit_bytes=vmem_limit,
        ),
        cost_estimate=cost,
    )(encoding)


def repitition_ref(encoding, finallength: int):
    """Pure-numpy reference matching the PyTorch module's semantics."""
    B, L, D = encoding.shape
    reps = finallength // L
    gap = finallength % L
    gapstart = (gap + 1) // 2
    idx = np.clip((np.arange(finallength) - gapstart) // reps, 0, L - 1)
    return np.asarray(encoding)[:, idx, :]


if __name__ == "__main__":
    key = jax.random.PRNGKey(0)

    # Exercise all three branches of the original forward: gap == 0, 1, >= 2.
    batch, enc_len, dim = 2, 8, 32
    encoding = jax.random.normal(key, (batch, enc_len, dim), dtype=jnp.float32)
    for finallength in (16, 17, 21):
        out = jax.block_until_ready(repitition(encoding, finallength))
        ref = repitition_ref(encoding, finallength)
        assert out.shape == (batch, finallength, dim), out.shape
        np.testing.assert_array_equal(np.asarray(out), ref)

    # Lane-dense feature dim (multiple of 128) with an odd gap.
    enc2 = jax.random.normal(jax.random.PRNGKey(1), (2, 8, 128), dtype=jnp.float32)
    out2 = jax.block_until_ready(repitition(enc2, 27))
    np.testing.assert_array_equal(np.asarray(out2), repitition_ref(enc2, 27))

    # Single-row encoder edge case (start == end == only row).
    enc3 = jax.random.normal(jax.random.PRNGKey(2), (1, 1, 32), dtype=jnp.float32)
    out3 = jax.block_until_ready(repitition(enc3, 9))
    np.testing.assert_array_equal(np.asarray(out3), repitition_ref(enc3, 9))

    print("KERNEL_OK")
</pallas_src>

<mosaic_0001>
module attributes {stable_mosaic.version = 11 : i64} {
  func.func @_repitition_kernel(%arg0: i32, %arg1: i32, %arg2: memref<1x8x32xf32, #tpu.memory_space<vmem>>, %arg3: memref<1x16x32xf32, #tpu.memory_space<vmem>>) attributes {dimension_semantics = [#tpu.dimension_semantics<parallel>, #tpu.dimension_semantics<parallel>], iteration_bounds = array<i64: 2, 1>, scalar_prefetch = 0 : i64, scratch_operands = 0 : i64, tpu.core_type = #tpu.core_type<tc>, window_params = [{transform_indices = @transform_0, window_bounds = array<i64: 1, 8, 32>}, {transform_indices = @transform_1, window_bounds = array<i64: 1, 16, 32>}]} {
    %c0 = arith.constant 0 : index
    %c0_0 = arith.constant 0 : index
    %c0_1 = arith.constant 0 : index
    %0 = vector.load %arg2[%c0, %c0_0, %c0_1] : memref<1x8x32xf32, #tpu.memory_space<vmem>>, vector<1x1x32xf32>
    %1 = vector.shape_cast %0 : vector<1x1x32xf32> to vector<1x32xf32>
    %2 = vector.shape_cast %1 : vector<1x32xf32> to vector<1x32xf32>
    %3 = vector.broadcast %2 : vector<1x32xf32> to vector<2x32xf32>
    %c0_2 = arith.constant 0 : index
    %c0_3 = arith.constant 0 : index
    %c0_4 = arith.constant 0 : index
    %4 = vector.load %arg3[%c0_2, %c0_3, %c0_4] : memref<1x16x32xf32, #tpu.memory_space<vmem>>, vector<1x2x32xf32>
    %5 = vector.shape_cast %4 : vector<1x2x32xf32> to vector<2x32xf32>
    %6 = vector.shape_cast %3 : vector<2x32xf32> to vector<1x2x32xf32>
    tpu.vector_store %arg3[%c0_2, %c0_3, %c0_4], %6 {strides = array<i32>} : memref<1x16x32xf32, #tpu.memory_space<vmem>>, vector<1x2x32xf32>,
    %c0_5 = arith.constant 0 : index
    %c1 = arith.constant 1 : index
    %c0_6 = arith.constant 0 : index
    %7 = vector.load %arg2[%c0_5, %c1, %c0_6] : memref<1x8x32xf32, #tpu.memory_space<vmem>>, vector<1x1x32xf32>
    %8 = vector.shape_cast %7 : vector<1x1x32xf32> to vector<1x32xf32>
    %9 = vector.shape_cast %8 : vector<1x32xf32> to vector<1x32xf32>
    %10 = vector.broadcast %9 : vector<1x32xf32> to vector<2x32xf32>
    %c0_7 = arith.constant 0 : index
    %c2 = arith.constant 2 : index
    %c0_8 = arith.constant 0 : index
    %11 = vector.load %arg3[%c0_7, %c2, %c0_8] : memref<1x16x32xf32, #tpu.memory_space<vmem>>, vector<1x2x32xf32>
    %12 = vector.shape_cast %11 : vector<1x2x32xf32> to vector<2x32xf32>
    %13 = vector.shape_cast %10 : vector<2x32xf32> to vector<1x2x32xf32>
    tpu.vector_store %arg3[%c0_7, %c2, %c0_8], %13 {strides = array<i32>} : memref<1x16x32xf32, #tpu.memory_space<vmem>>, vector<1x2x32xf32>,
    %c0_9 = arith.constant 0 : index
    %c2_10 = arith.constant 2 : index
    %c0_11 = arith.constant 0 : index
    %14 = vector.load %arg2[%c0_9, %c2_10, %c0_11] : memref<1x8x32xf32, #tpu.memory_space<vmem>>, vector<1x1x32xf32>
    %15 = vector.shape_cast %14 : vector<1x1x32xf32> to vector<1x32xf32>
    %16 = vector.shape_cast %15 : vector<1x32xf32> to vector<1x32xf32>
    %17 = vector.broadcast %16 : vector<1x32xf32> to vector<2x32xf32>
    %c0_12 = arith.constant 0 : index
    %c4 = arith.constant 4 : index
    %c0_13 = arith.constant 0 : index
    %18 = vector.load %arg3[%c0_12, %c4, %c0_13] : memref<1x16x32xf32, #tpu.memory_space<vmem>>, vector<1x2x32xf32>
    %19 = vector.shape_cast %18 : vector<1x2x32xf32> to vector<2x32xf32>
    %20 = vector.shape_cast %17 : vector<2x32xf32> to vector<1x2x32xf32>
    tpu.vector_store %arg3[%c0_12, %c4, %c0_13], %20 {strides = array<i32>} : memref<1x16x32xf32, #tpu.memory_space<vmem>>, vector<1x2x32xf32>,
    %c0_14 = arith.constant 0 : index
    %c3 = arith.constant 3 : index
    %c0_15 = arith.constant 0 : index
    %21 = vector.load %arg2[%c0_14, %c3, %c0_15] : memref<1x8x32xf32, #tpu.memory_space<vmem>>, vector<1x1x32xf32>
    %22 = vector.shape_cast %21 : vector<1x1x32xf32> to vector<1x32xf32>
    %23 = vector.shape_cast %22 : vector<1x32xf32> to vector<1x32xf32>
    %24 = vector.broadcast %23 : vector<1x32xf32> to vector<2x32xf32>
    %c0_16 = arith.constant 0 : index
    %c6 = arith.constant 6 : index
    %c0_17 = arith.constant 0 : index
    %25 = vector.load %arg3[%c0_16, %c6, %c0_17] : memref<1x16x32xf32, #tpu.memory_space<vmem>>, vector<1x2x32xf32>
    %26 = vector.shape_cast %25 : vector<1x2x32xf32> to vector<2x32xf32>
    %27 = vector.shape_cast %24 : vector<2x32xf32> to vector<1x2x32xf32>
    tpu.vector_store %arg3[%c0_16, %c6, %c0_17], %27 {strides = array<i32>} : memref<1x16x32xf32, #tpu.memory_space<vmem>>, vector<1x2x32xf32>,
    %c0_18 = arith.constant 0 : index
    %c4_19 = arith.constant 4 : index
    %c0_20 = arith.constant 0 : index
    %28 = vector.load %arg2[%c0_18, %c4_19, %c0_20] : memref<1x8x32xf32, #tpu.memory_space<vmem>>, vector<1x1x32xf32>
    %29 = vector.shape_cast %28 : vector<1x1x32xf32> to vector<1x32xf32>
    %30 = vector.shape_cast %29 : vector<1x32xf32> to vector<1x32xf32>
    %31 = vector.broadcast %30 : vector<1x32xf32> to vector<2x32xf32>
    %c0_21 = arith.constant 0 : index
    %c8 = arith.constant 8 : index
    %c0_22 = arith.constant 0 : index
    %32 = vector.load %arg3[%c0_21, %c8, %c0_22] : memref<1x16x32xf32, #tpu.memory_space<vmem>>, vector<1x2x32xf32>
    %33 = vector.shape_cast %32 : vector<1x2x32xf32> to vector<2x32xf32>
    %34 = vector.shape_cast %31 : vector<2x32xf32> to vector<1x2x32xf32>
    tpu.vector_store %arg3[%c0_21, %c8, %c0_22], %34 {strides = array<i32>} : memref<1x16x32xf32, #tpu.memory_space<vmem>>, vector<1x2x32xf32>,
    %c0_23 = arith.constant 0 : index
    %c5 = arith.constant 5 : index
    %c0_24 = arith.constant 0 : index
    %35 = vector.load %arg2[%c0_23, %c5, %c0_24] : memref<1x8x32xf32, #tpu.memory_space<vmem>>, vector<1x1x32xf32>
    %36 = vector.shape_cast %35 : vector<1x1x32xf32> to vector<1x32xf32>
    %37 = vector.shape_cast %36 : vector<1x32xf32> to vector<1x32xf32>
    %38 = vector.broadcast %37 : vector<1x32xf32> to vector<2x32xf32>
    %c0_25 = arith.constant 0 : index
    %c10 = arith.constant 10 : index
    %c0_26 = arith.constant 0 : index
    %39 = vector.load %arg3[%c0_25, %c10, %c0_26] : memref<1x16x32xf32, #tpu.memory_space<vmem>>, vector<1x2x32xf32>
    %40 = vector.shape_cast %39 : vector<1x2x32xf32> to vector<2x32xf32>
    %41 = vector.shape_cast %38 : vector<2x32xf32> to vector<1x2x32xf32>
    tpu.vector_store %arg3[%c0_25, %c10, %c0_26], %41 {strides = array<i32>} : memref<1x16x32xf32, #tpu.memory_space<vmem>>, vector<1x2x32xf32>,
    %c0_27 = arith.constant 0 : index
    %c6_28 = arith.constant 6 : index
    %c0_29 = arith.constant 0 : index
    %42 = vector.load %arg2[%c0_27, %c6_28, %c0_29] : memref<1x8x32xf32, #tpu.memory_space<vmem>>, vector<1x1x32xf32>
    %43 = vector.shape_cast %42 : vector<1x1x32xf32> to vector<1x32xf32>
    %44 = vector.shape_cast %43 : vector<1x32xf32> to vector<1x32xf32>
    %45 = vector.broadcast %44 : vector<1x32xf32> to vector<2x32xf32>
    %c0_30 = arith.constant 0 : index
    %c12 = arith.constant 12 : index
    %c0_31 = arith.constant 0 : index
    %46 = vector.load %arg3[%c0_30, %c12, %c0_31] : memref<1x16x32xf32, #tpu.memory_space<vmem>>, vector<1x2x32xf32>
    %47 = vector.shape_cast %46 : vector<1x2x32xf32> to vector<2x32xf32>
    %48 = vector.shape_cast %45 : vector<2x32xf32> to vector<1x2x32xf32>
    tpu.vector_store %arg3[%c0_30, %c12, %c0_31], %48 {strides = array<i32>} : memref<1x16x32xf32, #tpu.memory_space<vmem>>, vector<1x2x32xf32>,
    %c0_32 = arith.constant 0 : index
    %c7 = arith.constant 7 : index
    %c0_33 = arith.constant 0 : index
    %49 = vector.load %arg2[%c0_32, %c7, %c0_33] : memref<1x8x32xf32, #tpu.memory_space<vmem>>, vector<1x1x32xf32>
    %50 = vector.shape_cast %49 : vector<1x1x32xf32> to vector<1x32xf32>
    %51 = vector.shape_cast %50 : vector<1x32xf32> to vector<1x32xf32>
    %52 = vector.broadcast %51 : vector<1x32xf32> to vector<2x32xf32>
    %c0_34 = arith.constant 0 : index
    %c14 = arith.constant 14 : index
    %c0_35 = arith.constant 0 : index
    %53 = vector.load %arg3[%c0_34, %c14, %c0_35] : memref<1x16x32xf32, #tpu.memory_space<vmem>>, vector<1x2x32xf32>
    %54 = vector.shape_cast %53 : vector<1x2x32xf32> to vector<2x32xf32>
    %55 = vector.shape_cast %52 : vector<2x32xf32> to vector<1x2x32xf32>
    tpu.vector_store %arg3[%c0_34, %c14, %c0_35], %55 {strides = array<i32>} : memref<1x16x32xf32, #tpu.memory_space<vmem>>, vector<1x2x32xf32>,
    return
  }
  func.func @transform_0(%arg0: i32, %arg1: i32) -> (i32, i32, i32) {
    %c0_i32 = arith.constant 0 : i32
    %c0_i32_0 = arith.constant 0 : i32
    return %arg0, %c0_i32, %arg1 : i32, i32, i32
  }
  func.func @transform_1(%arg0: i32, %arg1: i32) -> (i32, i32, i32) {
    %c0_i32 = arith.constant 0 : i32
    %c0_i32_0 = arith.constant 0 : i32
    return %arg0, %c0_i32, %arg1 : i32, i32, i32
  }
}

</mosaic_0001>

<llo_original>
// kernel: tpu_custom_call.1
$region0: #{tpu_custom_call.1}
  #allocation0 [shape = 'u32[]', space=smem, size = 0x4, offset = 0x4, fixed_abs, tag = 'smem constant byte address 0x4 - core index']
  #allocation1 [shape = 'u32[144,128]{1,0:T(1,128)}', space=vmem, size = 0x12000, scoped, tag = 'internal scratch']
  %s0 = inlined_call_operand.hbm [shape: f32[2,8,32], index: 0, kind: input, shape index: {}]
  %s1 = inlined_call_operand.hbm [shape: f32[2,16,32], index: 1, kind: output, shape index: {}]
  %s2 = sld [smem:[#allocation0]]
  $region41: #{tpu_custom_call.1} parent=0
    _
  %s4 = ssub.s32 1, %s2
  %s5 = scalar_select 0, %s4, %s2
  $region1: #{tpu_custom_call.1} parent=0
    #allocation2 [shape = 'u8[8192]{0}', space=vmem, size = 0x2000, scoped, tag = 'input window, operand 0']
    #allocation3 [shape = 's32[2]{0}', space=sflag, size = 0x8, scoped, tag = 'scoped memory for tpu_custom_call.1']
    #allocation4 [shape = 's32[2]{0}', space=sflag, size = 0x8, scoped, tag = 'scoped memory for tpu_custom_call.1']
    #allocation5 [shape = 'u8[16384]{0}', space=vmem, size = 0x4000, scoped, tag = 'output window, operand 0']
    %6 = vsyncpa [#allocation3], 0
    %s7 = scalar_lea.sflag [#allocation3], 1
    %8 = vsyncpa %s7, 0
    %9 = vsyncpa [#allocation4], 0
    %s10 = scalar_lea.sflag [#allocation4], 1
    %11 = vsyncpa %s10, 0
    loop: start=0, step=1, limit=4
    $region2: #{tpu_custom_call.1} parent=1 // loop_pre_header
      _
    $region3: #{tpu_custom_call.1} parent=1 // loop_header
      %s13 = sphi 0, %s17
      %p14 = scmp.ge.s32.totalorder %s13, 4
      %s20 = sphi 0, %s32
      %s21 = sphi 0, %s28
      %s22 = sphi 0, %s20
      %s23 = sphi 0, %s21
      %s24 = sphi 0, %s22
      %s25 = sphi 0, %s23
      %s37 = sphi 0, %s39
      %s40 = sphi 0, %s37
      %s41 = sphi 0, %s40
      %s57 = sphi 0, %s41
      %s65 = sphi 0, %s67
      %s68 = sphi 0, %s65
      %s69 = sphi 0, %s68
      %s85 = sphi 0, %s69
    $region4: #{tpu_custom_call.1} parent=1 // loop_header_branch
      %16 = sbr.rel (%p14) target = $region8
    $region5: #{tpu_custom_call.1} parent=1 // loop_body
      %s18 = ssub.s32 %s13, 1
      %s19 = ssub.s32 %s13, 2
      %s26 = sadd.s32 1, %s21
      %p27 = scmp.ge.s32.totalorder %s26, 1
      %s28 = scalar_select %p27, 0, %s26
      %s29 = sadd.s32 1, %s20
      %s30 = scalar_select %p27, %s29, %s20
      %p31 = scmp.ge.s32.totalorder %s30, 2
      %s32 = scalar_select %p31, 0, %s30
      %s33 = ssub.s32 %s20, %s32
      %s34 = ssub.s32 %s21, %s28
      %s35 = sor.u32 %s33, %s34
      %p36 = scmp.eq.s32.totalorder %s35, 0
      %s38 = sadd.s32 %s37, 1
      %s39 = scalar_select %p36, %s37, %s38
      %p42 = pneg %p36
      %p43 = scmp.eq.s32.totalorder %s13, 1
      %p44 = por %p42, %p43
      %p45 = scmp.ne.s32.totalorder %s37, %s40
      %p46 = scmp.eq.s32.totalorder %s13, 0
      %p47 = por %p45, %p46
      %p48 = scmp.ne.s32.totalorder %s37, %s40
      %p49 = scmp.eq.s32.totalorder %s18, 1
      %p50 = por %p48, %p49
      %p51 = scmp.ne.s32.totalorder %s40, %s41
      %p52 = scmp.eq.s32.totalorder %s18, 0
      %p53 = por %p51, %p52
      %p54 = scmp.ne.s32.totalorder %s40, %s41
      %p55 = scmp.eq.s32.totalorder %s19, 1
      %p56 = por %p54, %p55
      %p58 = scmp.ne.s32.totalorder %s41, %s57
      %p59 = scmp.eq.s32.totalorder %s19, 0
      %p60 = por %p58, %p59
      %s61 = ssub.s32 %s20, %s32
      %s62 = ssub.s32 %s21, %s28
      %s63 = sor.u32 %s61, %s62
      %p64 = scmp.eq.s32.totalorder %s63, 0
      %s66 = sadd.s32 %s65, 1
      %s67 = scalar_select %p64, %s65, %s66
      %p70 = pneg %p64
      %p71 = scmp.eq.s32.totalorder %s13, 1
      %p72 = por %p70, %p71
      %p73 = scmp.ne.s32.totalorder %s65, %s68
      %p74 = scmp.eq.s32.totalorder %s13, 0
      %p75 = por %p73, %p74
      %p76 = scmp.ne.s32.totalorder %s65, %s68
      %p77 = scmp.eq.s32.totalorder %s18, 1
      %p78 = por %p76, %p77
      %p79 = scmp.ne.s32.totalorder %s68, %s69
      %p80 = scmp.eq.s32.totalorder %s18, 0
      %p81 = por %p79, %p80
      %p82 = scmp.ne.s32.totalorder %s68, %s69
      %p83 = scmp.eq.s32.totalorder %s19, 1
      %p84 = por %p82, %p83
      %p86 = scmp.ne.s32.totalorder %s69, %s85
      %p87 = scmp.eq.s32.totalorder %s19, 0
      %p88 = por %p86, %p87
      %p89 = scmp.le.s32.totalorder 1, %s13
      %p90 = scmp.lt.s32.totalorder %s13, 3
      %p91 = pnand %p89, %p90
      %p92 = pneg %p91
      // Predicated region
      $region9: #{tpu_custom_call.1} parent=5 // pred_check
        _
      $region10: #{tpu_custom_call.1} parent=5 // pred_check_branch
        %94 = sbr.rel (%p91) target = $region12
      $region11: #{tpu_custom_call.1} parent=5 // pred_region
        %s95 = ssub.s32 %s13, 1
      $region12: #{tpu_custom_call.1} parent=5 // pred_fallthru
        _
      %p96 = scmp.lt.s32.totalorder %s13, 2
      // Predicated region
      $region13: #{tpu_custom_call.1} parent=5 // pred_check
        %p97 = pneg %p96
      $region14: #{tpu_custom_call.1} parent=5 // pred_check_branch
        %99 = sbr.rel (%p97) target = $region16
      $region15: #{tpu_custom_call.1} parent=5 // pred_region
        // Predicated region
        $region17: #{tpu_custom_call.1} parent=15 // pred_check
          %p100 = pneg %p47
        $region18: #{tpu_custom_call.1} parent=15 // pred_check_branch
          %102 = sbr.rel (%p100) target = $region20
        $region19: #{tpu_custom_call.1} parent=15 // pred_region
          %s103 = sand.u32 %s37, 1
          %s104 = scalar_lea.sflag [#allocation3], %s103
          %s105 = sand.u32 %s37, 1
          %s106 = smul.addr %s105, 8
          %s107 = scalar_lea.vmem [#allocation2], %s106
          %s109 = ssub.s32 128, 128
          %110 = vsyncadd %s104, %s109
          %s111 = sadd.s32 %s21, %s20
          %s112 = smul.addr %s111, 128
          %s113 = scalar_lea.hbm %s0, %s112
          %s115 = sshll.u32 %s107, 4
          %s116 = int_to_ptr.vmem [resolvable:$true] %s115
          %118 = dma.hbm_to_vmem [thread:$0]  %s113, 128, %s116, %s104
        $region20: #{tpu_custom_call.1} parent=15 // pred_fallthru
          _
      $region16: #{tpu_custom_call.1} parent=5 // pred_fallthru
        _
      %p119 = scmp.le.s32.totalorder 1, %s13
      %p120 = scmp.lt.s32.totalorder %s13, 3
      %p121 = pnand %p119, %p120
      %p122 = pneg %p121
      // Predicated region
      $region21: #{tpu_custom_call.1} parent=5 // pred_check
        _
      $region22: #{tpu_custom_call.1} parent=5 // pred_check_branch
        %124 = sbr.rel (%p121) target = $region24
      $region23: #{tpu_custom_call.1} parent=5 // pred_region
        %s125 = ssub.s32 %s13, 1
        %s126 = sand.u32 %s40, 1
        %s127 = scalar_lea.sflag [#allocation3], %s126
        %s128 = sand.u32 %s40, 1
        %s129 = smul.addr %s128, 8
        %s130 = scalar_lea.vmem [#allocation2], %s129
        // Predicated region
        $region25: #{tpu_custom_call.1} parent=23 // pred_check
          %p131 = pneg %p53
        $region26: #{tpu_custom_call.1} parent=23 // pred_check_branch
          %133 = sbr.rel (%p131) target = $region28
        $region27: #{tpu_custom_call.1} parent=23 // pred_region
          %134 = dma.done %s127, 128
        $region28: #{tpu_custom_call.1} parent=23 // pred_fallthru
          _
        %s135 = sand.u32 %s40, 1
        %s136 = scalar_lea.sflag [#allocation3], %s135
        %s137 = sand.u32 %s40, 1
        %s138 = smul.addr %s137, 8
        %s139 = scalar_lea.vmem [#allocation2], %s138
        %p140 = pneg %p53
        %p141 = pneg %p50
        %p142 = pneg %p81
        %p143 = pneg %p78
        %s144 = sand.u32 %s68, 1
        %s145 = scalar_lea.sflag [#allocation4], %s144
        %s146 = sand.u32 %s68, 1
        %s147 = smul.addr %s146, 16
        %s148 = scalar_lea.vmem [#allocation5], %s147
        %v149 = vld [vmem:[%s130] sm:$0x1]
        %v150 = vlaneseq
        %v151 = vshrl.u32 %v150, 7
        %v152 = vsub.s32 0, %v151
        %v153 = vrot.slane %v149, %v152
        %vm154 = vcmask 254976
        %155 = vst.msk [vmem:[%s148] sm:$0x3] %vm154, %v153
        %v156 = vld [vmem:[%s130 + $0x1] sm:$0x1]
        %v157 = vlaneseq
        %v158 = vshrl.u32 %v157, 7
        %v159 = vsub.s32 0, %v158
        %v160 = vrot.slane %v156, %v159
        %161 = vst.msk [vmem:[%s148 + $0x2] sm:$0x3] %vm154, %v160
        %v162 = vld [vmem:[%s130 + $0x2] sm:$0x1]
        %v163 = vlaneseq
        %v164 = vshrl.u32 %v163, 7
        %v165 = vsub.s32 0, %v164
        %v166 = vrot.slane %v162, %v165
        %167 = vst.msk [vmem:[%s148 + $0x4] sm:$0x3] %vm154, %v166
        %v168 = vld [vmem:[%s130 + $0x3] sm:$0x1]
        %v169 = vlaneseq
        %v170 = vshrl.u32 %v169, 7
        %v171 = vsub.s32 0, %v170
        %v172 = vrot.slane %v168, %v171
        %173 = vst.msk [vmem:[%s148 + $0x6] sm:$0x3] %vm154, %v172
        %v174 = vld [vmem:[%s130 + $0x4] sm:$0x1]
        %v175 = vlaneseq
        %v176 = vshrl.u32 %v175, 7
        %v177 = vsub.s32 0, %v176
        %v178 = vrot.slane %v174, %v177
        %179 = vst.msk [vmem:[%s148 + $0x8] sm:$0x3] %vm154, %v178
        %v180 = vld [vmem:[%s130 + $0x5] sm:$0x1]
        %v181 = vlaneseq
        %v182 = vshrl.u32 %v181, 7
        %v183 = vsub.s32 0, %v182
        %v184 = vrot.slane %v180, %v183
        %185 = vst.msk [vmem:[%s148 + $0xa] sm:$0x3] %vm154, %v184
        %v186 = vld [vmem:[%s130 + $0x6] sm:$0x1]
        %v187 = vlaneseq
        %v188 = vshrl.u32 %v187, 7
        %v189 = vsub.s32 0, %v188
        %v190 = vrot.slane %v186, %v189
        %191 = vst.msk [vmem:[%s148 + $0xc] sm:$0x3] %vm154, %v190
        %v192 = vld [vmem:[%s130 + $0x7] sm:$0x1]
        %v193 = vlaneseq
        %v194 = vshrl.u32 %v193, 7
        %v195 = vsub.s32 0, %v194
        %v196 = vrot.slane %v192, %v195
        %197 = vst.msk [vmem:[%s148 + $0xe] sm:$0x3] %vm154, %v196
        %s198 = sand.u32 %s68, 1
        %s199 = scalar_lea.sflag [#allocation4], %s198
        %s200 = sand.u32 %s68, 1
        %s201 = smul.addr %s200, 16
        %s202 = scalar_lea.vmem [#allocation5], %s201
        // Predicated region
        $region29: #{tpu_custom_call.1} parent=23 // pred_check
          %p203 = pneg %p78
        $region30: #{tpu_custom_call.1} parent=23 // pred_check_branch
          %205 = sbr.rel (%p203) target = $region32
        $region31: #{tpu_custom_call.1} parent=23 // pred_region
          %s207 = ssub.s32 256, 256
          %208 = vsyncadd %s199, %s207
          %s209 = smul.addr %s22, 2
          %s210 = sadd.s32 %s23, %s209
          %s211 = smul.addr %s210, 128
          %s212 = scalar_lea.hbm %s1, %s211
          %s213 = sshll.u32 %s202, 4
          %s214 = int_to_ptr.vmem [resolvable:$true] %s213
          %219 = dma.vmem_to_hbm [thread:$0]  %s214, 256, %s212, %s199, 128, 128, 8
        $region32: #{tpu_custom_call.1} parent=23 // pred_fallthru
          _
      $region24: #{tpu_custom_call.1} parent=5 // pred_fallthru
        _
      %p220 = scmp.le.s32.totalorder 2, %s13
      // Predicated region
      $region33: #{tpu_custom_call.1} parent=5 // pred_check
        %p221 = pneg %p220
      $region34: #{tpu_custom_call.1} parent=5 // pred_check_branch
        %223 = sbr.rel (%p221) target = $region36
      $region35: #{tpu_custom_call.1} parent=5 // pred_region
        %s224 = ssub.s32 %s13, 2
        // Predicated region
        $region37: #{tpu_custom_call.1} parent=35 // pred_check
          %p225 = pneg %p84
        $region38: #{tpu_custom_call.1} parent=35 // pred_check_branch
          %227 = sbr.rel (%p225) target = $region40
        $region39: #{tpu_custom_call.1} parent=35 // pred_region
          %s228 = sand.u32 %s69, 1
          %s229 = scalar_lea.sflag [#allocation4], %s228
          %s230 = sand.u32 %s69, 1
          %s231 = smul.addr %s230, 16
          %s232 = scalar_lea.vmem [#allocation5], %s231
          %233 = dma.done %s229, 256
        $region40: #{tpu_custom_call.1} parent=35 // pred_fallthru
          _
      $region36: #{tpu_custom_call.1} parent=5 // pred_fallthru
        _
    $region6: #{tpu_custom_call.1} parent=1 // loop_footer
      %s17 = sadd.s32 1, %s13
    $region7: #{tpu_custom_call.1} parent=1 // loop_footer_branch
      %12 = sbr.rel target = $region3
    $region8: #{tpu_custom_call.1} parent=1 // loop_exit
      _
    %234 = vsyncpa [#allocation3], 1
    %s235 = scalar_lea.sflag [#allocation3], 1
    %236 = vsyncpa %s235, 1
    %237 = vsyncpa [#allocation4], 1
    %s238 = scalar_lea.sflag [#allocation4], 1
    %239 = vsyncpa %s238, 1

</llo_original>
